<compile_context>
chip_gen: v5e
topology: v5e:2x2
jax: 0.10.0
libtpu: 0.0.40
codegen_flags: <defaults>
</compile_context>

<pallas_src>
import math
import functools

import jax
import jax.numpy as jnp
from jax.experimental import pallas as pl
from jax.experimental.pallas import tpu as pltpu


# Scoped-VMEM ceiling: safe on v5e/v6e (128 MiB physical) and v7x (64 MiB).
_VMEM_LIMIT = 64 * 1024 * 1024


def _pick_tile(dim, target, align):
    """Largest multiple of `align` <= target that divides dim; full dim if small
    or unalignable (full-dim blocks are always legal)."""
    if dim <= target or dim % align != 0:
        return dim
    t = (target // align) * align
    while t >= align:
        if dim % t == 0:
            return t
        t -= align
    return dim


# ----------------------------------------------------------------------------
# Pallas kernels
# ----------------------------------------------------------------------------

def _linear_kernel(x_ref, w_ref, b_ref, o_ref, acc_ref, *, activation):
    """Tiled y = act(x @ w + b). Grid = (M tiles, N tiles, K tiles)."""
    k = pl.program_id(2)

    @pl.when(k == 0)
    def _():
        acc_ref[...] = jnp.zeros_like(acc_ref)

    acc_ref[...] += jnp.dot(x_ref[...], w_ref[...],
                            preferred_element_type=jnp.float32)

    @pl.when(k == pl.num_programs(2) - 1)
    def _():
        y = acc_ref[...] + b_ref[...]
        if activation == "relu":
            y = jnp.maximum(y, 0.0)
        o_ref[...] = y.astype(o_ref.dtype)


def _linear_addln_kernel(x_ref, w_ref, b_ref, r_ref, g_ref, bt_ref,
                         o_ref, acc_ref):
    """Tiled y = LayerNorm((x @ w + b) + residual). Grid = (M tiles, K tiles).
    The full feature dim D stays in one block so LN can reduce over it."""
    k = pl.program_id(1)

    @pl.when(k == 0)
    def _():
        acc_ref[...] = jnp.zeros_like(acc_ref)

    acc_ref[...] += jnp.dot(x_ref[...], w_ref[...],
                            preferred_element_type=jnp.float32)

    @pl.when(k == pl.num_programs(1) - 1)
    def _():
        y = acc_ref[...] + b_ref[...] + r_ref[...]
        mu = jnp.mean(y, axis=-1, keepdims=True)
        var = jnp.mean(jnp.square(y - mu), axis=-1, keepdims=True)
        yn = (y - mu) * jax.lax.rsqrt(var + 1e-5)
        o_ref[...] = (yn * g_ref[...] + bt_ref[...]).astype(o_ref.dtype)


def _generator_kernel(x_ref, w_ref, b_ref, o_ref, acc_ref):
    """Tiled Linear to vocab + exact log_softmax. Grid = (M tiles, K tiles)."""
    k = pl.program_id(1)

    @pl.when(k == 0)
    def _():
        acc_ref[...] = jnp.zeros_like(acc_ref)

    acc_ref[...] += jnp.dot(x_ref[...], w_ref[...],
                            preferred_element_type=jnp.float32)

    @pl.when(k == pl.num_programs(1) - 1)
    def _():
        logits = acc_ref[...] + b_ref[...]
        m = jnp.max(logits, axis=-1, keepdims=True)
        s = logits - m
        lse = jnp.log(jnp.sum(jnp.exp(s), axis=-1, keepdims=True))
        o_ref[...] = (s - lse).astype(o_ref.dtype)


def _attention_kernel(q_ref, k_ref, v_ref, bias_ref, o_ref, *, num_heads, scale):
    """All heads of one batch element. q/k/v blocks are (1, S, D) bf16,
    bias block is (1, Sq, Sk) additive f32. Output is lane-dense (Sq, D)."""
    qb = q_ref[0]          # (Sq, D) bf16
    kb = k_ref[0]          # (Sk, D) bf16
    vb = v_ref[0]          # (Sk, D) bf16
    bias = bias_ref[0]     # (Sq, Sk) f32

    D = qb.shape[-1]
    Dh = D // num_heads
    outs = []
    for h in range(num_heads):       # static unroll over heads
        lo, hi = h * Dh, (h + 1) * Dh
        qh = qb[:, lo:hi]
        kh = kb[:, lo:hi]
        vh = vb[:, lo:hi]
        # q @ k^T without a materialized transpose (contract last dims).
        s = jax.lax.dot_general(qh, kh, (((1,), (1,)), ((), ())),
                                preferred_element_type=jnp.float32)
        s = s * scale + bias
        s = s - jnp.max(s, axis=-1, keepdims=True)
        p = jnp.exp(s)
        p = p * pl.reciprocal(jnp.sum(p, axis=-1, keepdims=True), approx=True)
        outs.append(jnp.dot(p.astype(vh.dtype), vh,
                            preferred_element_type=jnp.float32))
    o_ref[0] = jnp.concatenate(outs, axis=-1).astype(o_ref.dtype)


# ----------------------------------------------------------------------------
# Pallas wrappers
# ----------------------------------------------------------------------------

def pallas_linear(x, w, b, activation=None, out_dtype=jnp.float32,
                  tm=256, tn=512, tk=512):
    """x: (M, K), w: (K, N), b: (N,) -> (M, N). bf16 MXU, f32 accumulate."""
    M, K = x.shape
    N = w.shape[1]
    tm = _pick_tile(M, tm, 8)
    tn = _pick_tile(N, tn, 128)
    tk = _pick_tile(K, tk, 128)
    grid = (M // tm, N // tn, K // tk)
    kernel = functools.partial(_linear_kernel, activation=activation)
    return pl.pallas_call(
        kernel,
        out_shape=jax.ShapeDtypeStruct((M, N), out_dtype),
        grid_spec=pltpu.PrefetchScalarGridSpec(
            num_scalar_prefetch=0,
            grid=grid,
            in_specs=[
                pl.BlockSpec((tm, tk), lambda i, j, k: (i, k)),
                pl.BlockSpec((tk, tn), lambda i, j, k: (k, j)),
                pl.BlockSpec((1, tn), lambda i, j, k: (0, j)),
            ],
            out_specs=pl.BlockSpec((tm, tn), lambda i, j, k: (i, j)),
            scratch_shapes=[pltpu.VMEM((tm, tn), jnp.float32)],
        ),
        compiler_params=pltpu.CompilerParams(
            dimension_semantics=("parallel", "parallel", "arbitrary"),
            vmem_limit_bytes=_VMEM_LIMIT),
    )(x.astype(jnp.bfloat16), w.astype(jnp.bfloat16),
      b.reshape(1, N).astype(jnp.float32))


def pallas_linear_add_ln(x, w, b, residual, gamma, beta, tm=256, tk=512):
    """LayerNorm((x @ w + b) + residual); x: (M, K), w: (K, D) -> (M, D) f32."""
    M, K = x.shape
    D = w.shape[1]
    tm = _pick_tile(M, tm, 8)
    tk = _pick_tile(K, tk, 128)
    grid = (M // tm, K // tk)
    return pl.pallas_call(
        _linear_addln_kernel,
        out_shape=jax.ShapeDtypeStruct((M, D), jnp.float32),
        grid_spec=pltpu.PrefetchScalarGridSpec(
            num_scalar_prefetch=0,
            grid=grid,
            in_specs=[
                pl.BlockSpec((tm, tk), lambda i, k: (i, k)),
                pl.BlockSpec((tk, D), lambda i, k: (k, 0)),
                pl.BlockSpec((1, D), lambda i, k: (0, 0)),
                pl.BlockSpec((tm, D), lambda i, k: (i, 0)),
                pl.BlockSpec((1, D), lambda i, k: (0, 0)),
                pl.BlockSpec((1, D), lambda i, k: (0, 0)),
            ],
            out_specs=pl.BlockSpec((tm, D), lambda i, k: (i, 0)),
            scratch_shapes=[pltpu.VMEM((tm, D), jnp.float32)],
        ),
        compiler_params=pltpu.CompilerParams(
            dimension_semantics=("parallel", "arbitrary"),
            vmem_limit_bytes=_VMEM_LIMIT),
    )(x.astype(jnp.bfloat16), w.astype(jnp.bfloat16),
      b.reshape(1, D).astype(jnp.float32),
      residual.astype(jnp.float32),
      gamma.reshape(1, D).astype(jnp.float32),
      beta.reshape(1, D).astype(jnp.float32))


def pallas_generator(x, w, b, tm=256, tk=512):
    """x: (M, D), w: (D, V), b: (V,) -> log-probs (M, V)."""
    # TODO(synk): for very large vocab, tile V with an online logsumexp
    # accumulator instead of keeping full V resident per block.
    M, K = x.shape
    V = w.shape[1]
    tm = _pick_tile(M, tm, 8)
    tk = _pick_tile(K, tk, 128)
    grid = (M // tm, K // tk)
    return pl.pallas_call(
        _generator_kernel,
        out_shape=jax.ShapeDtypeStruct((M, V), jnp.float32),
        grid_spec=pltpu.PrefetchScalarGridSpec(
            num_scalar_prefetch=0,
            grid=grid,
            in_specs=[
                pl.BlockSpec((tm, tk), lambda i, k: (i, k)),
                pl.BlockSpec((tk, V), lambda i, k: (k, 0)),
                pl.BlockSpec((1, V), lambda i, k: (0, 0)),
            ],
            out_specs=pl.BlockSpec((tm, V), lambda i, k: (i, 0)),
            scratch_shapes=[pltpu.VMEM((tm, V), jnp.float32)],
        ),
        compiler_params=pltpu.CompilerParams(
            dimension_semantics=("parallel", "arbitrary"),
            vmem_limit_bytes=_VMEM_LIMIT),
    )(x.astype(jnp.bfloat16), w.astype(jnp.bfloat16),
      b.reshape(1, V).astype(jnp.float32))


def pallas_attention(q, k, v, bias, num_heads):
    """q: (B, Sq, D), k/v: (B, Sk, D), bias: (B, Sq, Sk) additive (0 / -1e9)."""
    B, Sq, D = q.shape
    Sk = k.shape[1]
    scale = 1.0 / math.sqrt(D // num_heads)
    kernel = functools.partial(_attention_kernel,
                               num_heads=num_heads, scale=scale)
    return pl.pallas_call(
        kernel,
        out_shape=jax.ShapeDtypeStruct((B, Sq, D), jnp.bfloat16),
        grid=(B,),
        in_specs=[
            pl.BlockSpec((1, Sq, D), lambda b: (b, 0, 0)),
            pl.BlockSpec((1, Sk, D), lambda b: (b, 0, 0)),
            pl.BlockSpec((1, Sk, D), lambda b: (b, 0, 0)),
            pl.BlockSpec((1, Sq, Sk), lambda b: (b, 0, 0)),
        ],
        out_specs=pl.BlockSpec((1, Sq, D), lambda b: (b, 0, 0)),
        compiler_params=pltpu.CompilerParams(
            dimension_semantics=("parallel",),
            vmem_limit_bytes=_VMEM_LIMIT),
    )(q.astype(jnp.bfloat16), k.astype(jnp.bfloat16), v.astype(jnp.bfloat16),
      bias.astype(jnp.float32))


# ----------------------------------------------------------------------------
# Model glue (reshapes / parameter plumbing in plain JAX)
# ----------------------------------------------------------------------------

def mask_to_bias(mask, Sq):
    """{0,1} mask (B, 1 or Sq, Sk) -> additive bias (B, Sq, Sk): 0 keep, -1e9 mask."""
    mask = mask.astype(jnp.float32)
    B = mask.shape[0]
    Sk = mask.shape[-1]
    bias = (1.0 - mask) * jnp.float32(-1e9)
    return jnp.broadcast_to(bias, (B, Sq, Sk))


def mha_block(x_q, x_kv, bias, p, H, ln_g, ln_b, self_attn):
    """Multi-head attention with fused QKV projection; the output projection is
    fused with Add & LayerNorm (residual = x_q)."""
    B, Sq, D = x_q.shape
    Sk = x_kv.shape[1]

    if self_attn:
        qkv = pallas_linear(x_q.reshape(B * Sq, D), p["wqkv"], p["bqkv"],
                            out_dtype=jnp.bfloat16)
        q = qkv[:, :D].reshape(B, Sq, D)
        k = qkv[:, D:2 * D].reshape(B, Sq, D)
        v = qkv[:, 2 * D:].reshape(B, Sq, D)
    else:
        q = pallas_linear(x_q.reshape(B * Sq, D),
                          p["wqkv"][:, :D], p["bqkv"][:D],
                          out_dtype=jnp.bfloat16).reshape(B, Sq, D)
        kv = pallas_linear(x_kv.reshape(B * Sk, D),
                           p["wqkv"][:, D:], p["bqkv"][D:],
                           out_dtype=jnp.bfloat16)
        k = kv[:, :D].reshape(B, Sk, D)
        v = kv[:, D:].reshape(B, Sk, D)

    attn = pallas_attention(q, k, v, bias, H)                 # (B, Sq, D) bf16
    out = pallas_linear_add_ln(attn.reshape(B * Sq, D), p["wo"], p["bo"],
                               residual=x_q.reshape(B * Sq, D),
                               gamma=ln_g, beta=ln_b)
    return out.reshape(B, Sq, D)


def ffn_block(x, p, ln_g, ln_b):
    """Position-wise FFN; second matmul fused with Add & LayerNorm."""
    B, S, D = x.shape
    h = pallas_linear(x.reshape(B * S, D), p["w1"], p["b1"],
                      activation="relu", out_dtype=jnp.bfloat16)
    y = pallas_linear_add_ln(h, p["w2"], p["b2"],
                             residual=x.reshape(B * S, D),
                             gamma=ln_g, beta=ln_b)
    return y.reshape(B, S, D)


def encoder_layer(x, bias, p, H):
    x = mha_block(x, x, bias, p["mha"], H, p["ln1_g"], p["ln1_b"], self_attn=True)
    x = ffn_block(x, p, p["ln2_g"], p["ln2_b"])
    return x


def decoder_layer(y, enc_out, cross_bias, self_bias, p, H):
    y = mha_block(y, y, self_bias, p["self_mha"], H,
                  p["ln1_g"], p["ln1_b"], self_attn=True)
    y = mha_block(y, enc_out, cross_bias, p["cross_mha"], H,
                  p["ln2_g"], p["ln2_b"], self_attn=False)
    y = ffn_block(y, p, p["ln3_g"], p["ln3_b"])
    return y


def transformer_forward(params, src_tokens, trg_tokens,
                        eng_mask, fr_pad_msk, fr_attn_msk, H):
    """Returns log-probabilities over vocab: (B, T, vocab)."""
    D = params["en_embed"].shape[1]
    B, S = src_tokens.shape
    T = trg_tokens.shape[1]
    emb_scale = math.sqrt(D)

    enc_bias = mask_to_bias(eng_mask, S)         # (B, S, S)
    cross_bias = mask_to_bias(fr_pad_msk, T)     # (B, T, S)
    self_bias = mask_to_bias(fr_attn_msk, T)     # (B, T, T)

    # --- encode ---
    # TODO(synk): embedding gather kept in plain JAX (data-dependent gather).
    x = jnp.take(params["en_embed"], src_tokens, axis=0) * emb_scale
    x = x + params["pe"][:S][None, :, :]
    for lp in params["enc_layers"]:
        x = encoder_layer(x, enc_bias, lp, H)
    enc_out = x

    # --- decode ---
    y = jnp.take(params["fr_embed"], trg_tokens, axis=0) * emb_scale
    y = y + params["pe"][:T][None, :, :]
    for lp in params["dec_layers"]:
        y = decoder_layer(y, enc_out, cross_bias, self_bias, lp, H)

    # --- generator (Linear + log_softmax fused in one kernel) ---
    logp = pallas_generator(y.reshape(B * T, D), params["wg"], params["bg"])
    return logp.reshape(B, T, -1)


# ----------------------------------------------------------------------------
# Deterministic parameter initialization (xavier_normal_ for dim>1 params)
# ----------------------------------------------------------------------------

def xavier_normal(key, shape):
    fan_in, fan_out = shape[0], shape[1]
    std = math.sqrt(2.0 / (fan_in + fan_out))
    return std * jax.random.normal(key, shape, dtype=jnp.float32)


def init_mha(key, D):
    ks = jax.random.split(key, 4)
    wq = xavier_normal(ks[0], (D, D))
    wk = xavier_normal(ks[1], (D, D))
    wv = xavier_normal(ks[2], (D, D))
    return {"wqkv": jnp.concatenate([wq, wk, wv], axis=1),   # (D, 3D) fused
            "bqkv": jnp.zeros((3 * D,), jnp.float32),
            "wo": xavier_normal(ks[3], (D, D)),
            "bo": jnp.zeros((D,), jnp.float32)}


def init_enc_layer(key, D, Dff):
    ks = jax.random.split(key, 3)
    return {"mha": init_mha(ks[0], D),
            "ln1_g": jnp.ones((D,), jnp.float32), "ln1_b": jnp.zeros((D,), jnp.float32),
            "w1": xavier_normal(ks[1], (D, Dff)), "b1": jnp.zeros((Dff,), jnp.float32),
            "w2": xavier_normal(ks[2], (Dff, D)), "b2": jnp.zeros((D,), jnp.float32),
            "ln2_g": jnp.ones((D,), jnp.float32), "ln2_b": jnp.zeros((D,), jnp.float32)}


def init_dec_layer(key, D, Dff):
    ks = jax.random.split(key, 4)
    return {"self_mha": init_mha(ks[0], D),
            "ln1_g": jnp.ones((D,), jnp.float32), "ln1_b": jnp.zeros((D,), jnp.float32),
            "cross_mha": init_mha(ks[1], D),
            "ln2_g": jnp.ones((D,), jnp.float32), "ln2_b": jnp.zeros((D,), jnp.float32),
            "w1": xavier_normal(ks[2], (D, Dff)), "b1": jnp.zeros((Dff,), jnp.float32),
            "w2": xavier_normal(ks[3], (Dff, D)), "b2": jnp.zeros((D,), jnp.float32),
            "ln3_g": jnp.ones((D,), jnp.float32), "ln3_b": jnp.zeros((D,), jnp.float32)}


def make_positional_encoding(max_len, D):
    pos = jnp.arange(max_len, dtype=jnp.float32)[:, None]
    i = jnp.arange(0, D, 2, dtype=jnp.float32)
    div = jnp.exp(-math.log(10000.0) * i / D)
    pe = jnp.zeros((max_len, D), jnp.float32)
    pe = pe.at[:, 0::2].set(jnp.sin(pos * div))
    pe = pe.at[:, 1::2].set(jnp.cos(pos * div))
    return pe


def init_transformer(key, config):
    V = config["max_tokens"]
    D = config["model_dimension"]
    Dff = 4 * D
    kE, kF, kG, kEnc, kDec = jax.random.split(key, 5)
    enc_keys = jax.random.split(kEnc, config["encoderlayers"])
    dec_keys = jax.random.split(kDec, config["decoderlayers"])
    return {
        "en_embed": xavier_normal(kE, (V, D)),
        "fr_embed": xavier_normal(kF, (V, D)),
        "pe": make_positional_encoding(config["max_length"], D),
        "enc_layers": [init_enc_layer(k, D, Dff) for k in enc_keys],
        "dec_layers": [init_dec_layer(k, D, Dff) for k in dec_keys],
        "wg": xavier_normal(kG, (D, V)),
        "bg": jnp.zeros((V,), jnp.float32),
    }


# ----------------------------------------------------------------------------
# Main
# ----------------------------------------------------------------------------

if __name__ == "__main__":
    config = {
        "max_tokens": 64,        # vocab size
        "model_dimension": 32,   # D
        "max_length": 16,
        "heads": 4,
        "encoderlayers": 2,
        "decoderlayers": 2,
    }
    B, S_src, S_trg = 2, 8, 8

    root = jax.random.PRNGKey(0)
    k_par, k_src, k_trg = jax.random.split(root, 3)
    params = init_transformer(k_par, config)

    src_tokens = jax.random.randint(k_src, (B, S_src), 0, config["max_tokens"], jnp.int32)
    trg_tokens = jax.random.randint(k_trg, (B, S_trg), 0, config["max_tokens"], jnp.int32)

    # masks: 1 = attend, 0 = masked out
    src_valid = jnp.array([[1] * 8, [1] * 6 + [0] * 2], dtype=jnp.float32)   # (B, S_src)
    trg_valid = jnp.array([[1] * 8, [1] * 7 + [0] * 1], dtype=jnp.float32)   # (B, S_trg)

    eng_mask = src_valid[:, None, :]                                          # (B, 1, S_src)
    fr_pad_msk = src_valid[:, None, :]                                        # (B, 1, S_src)
    causal = jnp.tril(jnp.ones((S_trg, S_trg), jnp.float32))                  # (T, T)
    fr_attn_msk = causal[None, :, :] * trg_valid[:, None, :]                  # (B, T, T)

    out = transformer_forward(params, src_tokens, trg_tokens,
                              eng_mask, fr_pad_msk, fr_attn_msk,
                              H=config["heads"])
    out = jax.block_until_ready(out)

    assert out.shape == (B, S_trg, config["max_tokens"])
    assert bool(jnp.all(jnp.isfinite(out)))
    # rows of exp(log_softmax) should sum to ~1
    assert bool(jnp.allclose(jnp.sum(jnp.exp(out), axis=-1), 1.0, atol=1e-3))
    print("KERNEL_OK")
</pallas_src>

<mosaic_0001>
module attributes {stable_mosaic.version = 11 : i64} {
  func.func @_linear_kernel(%arg0: i32, %arg1: i32, %arg2: i32, %arg3: memref<16x32xbf16, #tpu.memory_space<vmem>>, %arg4: memref<32x96xbf16, #tpu.memory_space<vmem>>, %arg5: memref<1x96xf32, #tpu.memory_space<vmem>>, %arg6: memref<16x96xbf16, #tpu.memory_space<vmem>>, %arg7: memref<16x96xf32, #tpu.memory_space<vmem>>) attributes {dimension_semantics = [#tpu.dimension_semantics<parallel>, #tpu.dimension_semantics<parallel>, #tpu.dimension_semantics<arbitrary>], iteration_bounds = array<i64: 1, 1, 1>, scalar_prefetch = 0 : i64, scratch_operands = 1 : i64, tpu.core_type = #tpu.core_type<tc>, window_params = [{transform_indices = @transform_0, window_bounds = array<i64: 16, 32>}, {transform_indices = @transform_1, window_bounds = array<i64: 32, 96>}, {transform_indices = @transform_2, window_bounds = array<i64: 1, 96>}, {transform_indices = @transform_3, window_bounds = array<i64: 16, 96>}]} {
    %c0_i32 = arith.constant 0 : i32
    %0 = arith.cmpi eq, %arg2, %c0_i32 : i32
    %1 = arith.extui %0 : i1 to i32
    %c0_i32_0 = arith.constant 0 : i32
    %2 = arith.cmpi ne, %1, %c0_i32_0 : i32
    scf.if %2 {
      %cst_10 = arith.constant 0.000000e+00 : f32
      %12 = vector.broadcast %cst_10 : f32 to vector<16x96xf32>
      %c0_11 = arith.constant 0 : index
      %c0_12 = arith.constant 0 : index
      %13 = vector.load %arg7[%c0_11, %c0_12] : memref<16x96xf32, #tpu.memory_space<vmem>>, vector<16x96xf32>
      tpu.vector_store %arg7[%c0_11, %c0_12], %12 {strides = array<i32>} : memref<16x96xf32, #tpu.memory_space<vmem>>, vector<16x96xf32>,
    } else {
    }
    %c0 = arith.constant 0 : index
    %c0_1 = arith.constant 0 : index
    %3 = vector.load %arg7[%c0, %c0_1] : memref<16x96xf32, #tpu.memory_space<vmem>>, vector<16x96xf32>
    %c0_2 = arith.constant 0 : index
    %c0_3 = arith.constant 0 : index
    %4 = vector.load %arg3[%c0_2, %c0_3] : memref<16x32xbf16, #tpu.memory_space<vmem>>, vector<16x32xbf16>
    %c0_4 = arith.constant 0 : index
    %c0_5 = arith.constant 0 : index
    %5 = vector.load %arg4[%c0_4, %c0_5] : memref<32x96xbf16, #tpu.memory_space<vmem>>, vector<32x96xbf16>
    %cst = arith.constant dense<0.000000e+00> : vector<16x96xf32>
    %6 = tpu.matmul %4, %5, %cst {dimension_numbers = #tpu.dot_dimension_numbers<[1], [0], [0], [1], [0, 0, 1, 1], [], []>} : vector<16x32xbf16>, vector<32x96xbf16>, vector<16x96xf32> -> vector<16x96xf32>
    %7 = arith.addf %3, %6 : vector<16x96xf32>
    %c0_6 = arith.constant 0 : index
    %c0_7 = arith.constant 0 : index
    %8 = vector.load %arg7[%c0_6, %c0_7] : memref<16x96xf32, #tpu.memory_space<vmem>>, vector<16x96xf32>
    tpu.vector_store %arg7[%c0_6, %c0_7], %7 {strides = array<i32>} : memref<16x96xf32, #tpu.memory_space<vmem>>, vector<16x96xf32>,
    %c0_i32_8 = arith.constant 0 : i32
    %9 = arith.cmpi eq, %arg2, %c0_i32_8 : i32
    %10 = arith.extui %9 : i1 to i32
    %c0_i32_9 = arith.constant 0 : i32
    %11 = arith.cmpi ne, %10, %c0_i32_9 : i32
    scf.if %11 {
      %c0_10 = arith.constant 0 : index
      %c0_11 = arith.constant 0 : index
      %12 = vector.load %arg7[%c0_10, %c0_11] : memref<16x96xf32, #tpu.memory_space<vmem>>, vector<16x96xf32>
      %c0_12 = arith.constant 0 : index
      %c0_13 = arith.constant 0 : index
      %13 = vector.load %arg5[%c0_12, %c0_13] : memref<1x96xf32, #tpu.memory_space<vmem>>, vector<1x96xf32>
      %14 = vector.broadcast %13 : vector<1x96xf32> to vector<16x96xf32>
      %15 = arith.addf %12, %14 : vector<16x96xf32>
      %16 = arith.truncf %15 : vector<16x96xf32> to vector<16x96xbf16>
      %c0_14 = arith.constant 0 : index
      %c0_15 = arith.constant 0 : index
      %17 = vector.load %arg6[%c0_14, %c0_15] : memref<16x96xbf16, #tpu.memory_space<vmem>>, vector<16x96xbf16>
      tpu.vector_store %arg6[%c0_14, %c0_15], %16 {strides = array<i32>} : memref<16x96xbf16, #tpu.memory_space<vmem>>, vector<16x96xbf16>,
    } else {
    }
    return
  }
  func.func @transform_0(%arg0: i32, %arg1: i32, %arg2: i32) -> (i32, i32) {
    %c0_i32 = arith.constant 0 : i32
    return %arg0, %arg2 : i32, i32
  }
  func.func @transform_1(%arg0: i32, %arg1: i32, %arg2: i32) -> (i32, i32) {
    %c0_i32 = arith.constant 0 : i32
    return %arg2, %arg1 : i32, i32
  }
  func.func @transform_2(%arg0: i32, %arg1: i32, %arg2: i32) -> (i32, i32) {
    %c0_i32 = arith.constant 0 : i32
    %c0_i32_0 = arith.constant 0 : i32
    return %c0_i32, %arg1 : i32, i32
  }
  func.func @transform_3(%arg0: i32, %arg1: i32, %arg2: i32) -> (i32, i32) {
    %c0_i32 = arith.constant 0 : i32
    return %arg0, %arg1 : i32, i32
  }
}

</mosaic_0001>

<llo_original>
// kernel: tpu_custom_call.1
$region0: #{tpu_custom_call.1}
  #allocation0 [shape = 'u32[]', space=smem, size = 0x4, offset = 0x4, fixed_abs, tag = 'smem constant byte address 0x4 - core index']
  #allocation1 [shape = 'u32[72,128]{1,0:T(1,128)}', space=vmem, size = 0x9000, scoped, tag = 'internal scratch']
  #allocation2 [shape = 'f32[16,96]{1,0:T(8,128)}', space=vmem, size = 0x2000, scoped, tag = 'scratch operand']
  %s0 = inlined_call_operand.hbm [shape: bf16[16,32], index: 0, kind: input, shape index: {}]
  %s1 = inlined_call_operand.hbm [shape: bf16[32,96], index: 1, kind: input, shape index: {}]
  %s2 = inlined_call_operand.vmem [shape: f32[1,96], index: 2, kind: input, shape index: {}]
  %s3 = inlined_call_operand.hbm [shape: bf16[16,96], index: 3, kind: output, shape index: {}]
  %s4 = sld [smem:[#allocation0]]
  $region38: #{tpu_custom_call.1} parent=0
    _
  %s6 = ssub.s32 1, %s4
  %s7 = scalar_select 0, %s6, %s4
  $region1: #{tpu_custom_call.1} parent=0
    #allocation3 [shape = 'u8[4096]{0}', space=vmem, size = 0x1000, scoped, tag = 'input window, operand 0, single buffered']
    #allocation4 [shape = 's32[1]{0}', space=sflag, size = 0x4, scoped, tag = 'scoped memory for tpu_custom_call.1']
    #allocation5 [shape = 's32[1]{0}', space=sflag, size = 0x4, scoped, tag = 'scoped memory for tpu_custom_call.1']
    #allocation6 [shape = 'u8[8192]{0}', space=vmem, size = 0x2000, scoped, tag = 'input window, operand 1, single buffered']
    #allocation7 [shape = 's32[1]{0}', space=sflag, size = 0x4, scoped, tag = 'scoped memory for tpu_custom_call.1']
    #allocation8 [shape = 'u8[4096]{0}', space=vmem, size = 0x1000, scoped, tag = 'output window, operand 0, single buffered']
    %8 = vsyncpa [#allocation4], 0
    %9 = vsyncpa [#allocation7], 0
    %10 = vsyncpa [#allocation5], 0
    // Predicated region
    $region2: #{tpu_custom_call.1} parent=1 // pred_check
      _
    $region3: #{tpu_custom_call.1} parent=1 // pred_check_branch
      %12 = sbr.rel (0) target = $region5
    $region4: #{tpu_custom_call.1} parent=1 // pred_region
      %14 = vsyncadd [#allocation4], 0
      %s15 = sshll.u32 %s0, 4
      %s16 = int_to_ptr.hbm [resolvable:$true] %s15
      %s17 = sshll.u32 [#allocation3], 4
      %s18 = int_to_ptr.vmem [resolvable:$true] %s17
      %23 = dma.hbm_to_vmem [thread:$0]  %s16, 128, %s18, [#allocation4], 64, 64, 4
    $region5: #{tpu_custom_call.1} parent=1 // pred_fallthru
      _
    // Predicated region
    $region6: #{tpu_custom_call.1} parent=1 // pred_check
      _
    $region7: #{tpu_custom_call.1} parent=1 // pred_check_branch
      %25 = sbr.rel (0) target = $region9
    $region8: #{tpu_custom_call.1} parent=1 // pred_region
      %27 = vsyncadd [#allocation7], 0
      %s28 = sshll.u32 %s1, 4
      %s29 = int_to_ptr.hbm [resolvable:$true] %s28
      %s30 = sshll.u32 [#allocation6], 4
      %s31 = int_to_ptr.vmem [resolvable:$true] %s30
      %36 = dma.hbm_to_vmem [thread:$0]  %s29, 256, %s31, [#allocation7], 64, 64, 4
    $region9: #{tpu_custom_call.1} parent=1 // pred_fallthru
      _
    // Predicated region
    $region10: #{tpu_custom_call.1} parent=1 // pred_check
      _
    $region11: #{tpu_custom_call.1} parent=1 // pred_check_branch
      %38 = sbr.rel (0) target = $region13
    $region12: #{tpu_custom_call.1} parent=1 // pred_region
      _
    $region13: #{tpu_custom_call.1} parent=1 // pred_fallthru
      _
    // Predicated region
    $region14: #{tpu_custom_call.1} parent=1 // pred_check
      _
    $region15: #{tpu_custom_call.1} parent=1 // pred_check_branch
      %40 = sbr.rel (0) target = $region17
    $region16: #{tpu_custom_call.1} parent=1 // pred_region
      %42 = dma.done [#allocation4], 128
    $region17: #{tpu_custom_call.1} parent=1 // pred_fallthru
      _
    // Predicated region
    $region18: #{tpu_custom_call.1} parent=1 // pred_check
      _
    $region19: #{tpu_custom_call.1} parent=1 // pred_check_branch
      %44 = sbr.rel (0) target = $region21
    $region20: #{tpu_custom_call.1} parent=1 // pred_region
      %46 = dma.done [#allocation7], 256
    $region21: #{tpu_custom_call.1} parent=1 // pred_fallthru
      _
    %p48 = scmp.eq.s32.totalorder 0, 0
    // Predicated region
    $region22: #{tpu_custom_call.1} parent=1 // pred_check
      %p49 = pneg %p48
    $region23: #{tpu_custom_call.1} parent=1 // pred_check_branch
      %51 = sbr.rel (%p49) target = $region25
    $region24: #{tpu_custom_call.1} parent=1 // pred_region
      %vm52 = vcmask 785408
      %53 = vst.msk [vmem:[#allocation2] sm:$0xff] %vm52, 0.0
      %54 = vst.msk [vmem:[#allocation2 + $0x8] sm:$0xff] %vm52, 0.0
    $region25: #{tpu_custom_call.1} parent=1 // pred_fallthru
      _
    %v55 = vld [vmem:[#allocation2] sm:$0xff]
    %v56 = vld [vmem:[#allocation2 + $0x8] sm:$0xff]
    %v57 = vld [vmem:[#allocation3] sm:$0xf]
    %v58 = vld [vmem:[#allocation3 + $0x4] sm:$0xf]
    %v59 = vld [vmem:[#allocation6] sm:$0xf]
    %v60 = vld [vmem:[#allocation6 + $0x4] sm:$0xf]
    %v61 = vld [vmem:[#allocation6 + $0x8] sm:$0xf]
    %v62 = vld [vmem:[#allocation6 + $0xc] sm:$0xf]
    %v65 = vunpack.c.l.b16 %v57
    %v66 = vunpack.c.l.b16 %v58
    %v67 = vpack.c.b16 %v66, %v65
    %v72 = vunpack.c.l.b16 %v59
    %v73 = vunpack.c.l.b16 %v60
    %v74 = vunpack.c.l.b16 %v61
    %v75 = vunpack.c.l.b16 %v62
    %v76 = vpack.c.b16 %v73, %v72
    %v77 = vpack.c.b16 %v75, %v74
    %vm80 = vcmask 261120
    %v82 = vsel %vm80, %v67, 0
    %84 = vmatpush.bf16.msra.mxu0 0
    %85 = vmatpush.bf16.msra.mxu0 0
    %86 = vmatpush.bf16.msra.mxu0 0
    %87 = vmatpush.bf16.msra.mxu0 0
    %88 = vmatpush.bf16.msra.mxu0 0
    %89 = vmatpush.bf16.msra.mxu0 0
    %90 = vmatpush.bf16.msra.mxu0 %v77
    %91 = vmatpush.bf16.msra.mxu0 %v76
    %92 = vmatmul.bf16.gmra.mxu0 %v82
    %v93 = vpop.f32.mrf.mxu0
    %v94 = vadd.f32 0.0, %v93
    %v95 = vpop.f32.mrf.mxu0
    %v96 = vadd.f32 0.0, %v95
    %97 = vdwg.mxu0
    %v98 = vadd.f32 %v55, %v94
    %v99 = vadd.f32 %v56, %v96
    %vm100 = vcmask 785408
    %101 = vst.msk [vmem:[#allocation2] sm:$0xff] %vm100, %v98
    %102 = vst.msk [vmem:[#allocation2 + $0x8] sm:$0xff] %vm100, %v99
    // Predicated region
    $region26: #{tpu_custom_call.1} parent=1 // pred_check
      %p103 = pneg %p48
    $region27: #{tpu_custom_call.1} parent=1 // pred_check_branch
      %105 = sbr.rel (%p103) target = $region29
    $region28: #{tpu_custom_call.1} parent=1 // pred_region
      %v106 = vld [vmem:[#allocation2] sm:$0xff]
      %v107 = vld [vmem:[#allocation2 + $0x8] sm:$0xff]
      %v108 = vld [vmem:[%s2] sm:$0x1]
      %v110 = vperm.slane %v108, 0
      %v112 = vadd.f32 %v106, %v110
      %v113 = vadd.f32 %v107, %v110
      %v114 = vpack.c.bf16 %v112, %v112
      %v115 = vpack.c.bf16 %v113, %v113
      %vm116 = vcmask 781312
      %117 = vst.msk [vmem:[#allocation8] sm:$0xf] %vm116, %v114
      %118 = vst.msk [vmem:[#allocation8 + $0x4] sm:$0xf] %vm116, %v115
    $region29: #{tpu_custom_call.1} parent=1 // pred_fallthru
      _
    // Predicated region
    $region30: #{tpu_custom_call.1} parent=1 // pred_check
      _
    $region31: #{tpu_custom_call.1} parent=1 // pred_check_branch
      %120 = sbr.rel (0) target = $region33
    $region32: #{tpu_custom_call.1} parent=1 // pred_region
      %122 = vsyncadd [#allocation5], 0
      %s123 = sshll.u32 [#allocation8], 4
      %s124 = int_to_ptr.vmem [resolvable:$true] %s123
      %s125 = sshll.u32 %s3, 4
      %s126 = int_to_ptr.hbm [resolvable:$true] %s125
      %131 = dma.vmem_to_hbm [thread:$0]  %s124, 128, %s126, [#allocation5], 64, 64, 4
    $region33: #{tpu_custom_call.1} parent=1 // pred_fallthru
      _
    // Predicated region
    $region34: #{tpu_custom_call.1} parent=1 // pred_check
      _
    $region35: #{tpu_custom_call.1} parent=1 // pred_check_branch
      %133 = sbr.rel (0) target = $region37
    $region36: #{tpu_custom_call.1} parent=1 // pred_region
      %135 = dma.done [#allocation5], 128
    $region37: #{tpu_custom_call.1} parent=1 // pred_fallthru
      _
    %136 = vsyncpa [#allocation4], 1
    %137 = vsyncpa [#allocation7], 1
    %138 = vsyncpa [#allocation5], 1

</llo_original>
